<compile_context>
chip_gen: v7x
topology: tpu7x:2x2x1
jax: 0.10.0
libtpu: 0.0.40
codegen_flags: <defaults>
</compile_context>

<pallas_src>
import jax
import jax.numpy as jnp
from jax.experimental import pallas as pl
from jax.experimental.pallas import tpu as pltpu


def _round_up(a, b):
    return (a + b - 1) // b * b


def _vmem_capacity_bytes():
    """Physical per-core VMEM bytes (generation aware); conservative fallback."""
    try:
        return int(pltpu.get_tpu_info().vmem_capacity_bytes)
    except Exception:
        return 64 * 2**20


# ---------------------------------------------------------------------------
# Kernels
# ---------------------------------------------------------------------------

def _ffn_resident_kernel(x_ref, w1x_ref, w1g_ref, b1x_ref, b1g_ref,
                         w2_ref, b2_ref, o_ref):
    """Whole FFN per row tile; weights are VMEM-resident (constant index_map ->
    fetched once for the whole grid)."""
    x = x_ref[...]
    xh = jnp.dot(x, w1x_ref[...], preferred_element_type=jnp.float32) + b1x_ref[...]
    gates = jnp.dot(x, w1g_ref[...], preferred_element_type=jnp.float32) + b1g_ref[...]

    # Exact (erf-based) GELU in f32, matching torch.nn.functional.gelu default.
    inv_sqrt2 = jnp.float32(0.7071067811865476)
    g = xh * (gates * 0.5 * (1.0 + jax.lax.erf(gates * inv_sqrt2)))

    # Dropout(p=0.0) is the identity -> no-op.
    o_ref[...] = (jnp.dot(g.astype(w2_ref.dtype), w2_ref[...],
                          preferred_element_type=jnp.float32)
                  + b2_ref[...]).astype(o_ref.dtype)


def _ffn_stream_kernel(x_ref, w1x_ref, w1g_ref, b1x_ref, b1g_ref,
                       w2_ref, b2_ref, o_ref, acc_ref):
    """Fallback for weights too large to be VMEM-resident: hidden axis is a
    reduction ("arbitrary") with an f32 accumulator."""
    k = pl.program_id(1)

    @pl.when(k == 0)
    def _():
        acc_ref[...] = jnp.zeros_like(acc_ref)

    x = x_ref[...]
    xh = jnp.dot(x, w1x_ref[...], preferred_element_type=jnp.float32) + b1x_ref[...]
    gates = jnp.dot(x, w1g_ref[...], preferred_element_type=jnp.float32) + b1g_ref[...]
    inv_sqrt2 = jnp.float32(0.7071067811865476)
    g = xh * (gates * 0.5 * (1.0 + jax.lax.erf(gates * inv_sqrt2)))

    acc_ref[...] += jnp.dot(g.astype(w2_ref.dtype), w2_ref[...],
                            preferred_element_type=jnp.float32)

    @pl.when(k == pl.num_programs(1) - 1)
    def _():
        o_ref[...] = (acc_ref[...] + b2_ref[...]).astype(o_ref.dtype)


# ---------------------------------------------------------------------------
# Parameter preparation (done ONCE, hoisted out of the per-call path)
# ---------------------------------------------------------------------------

def prepare_ffn_params(w1, b1, w2, b2, *, compute_dtype=None):
    """Split W1 into x/gate halves, cast, and lane-pad — once per parameter set.

    w1: (dim, 2*hidden)   b1: (2*hidden,)   w2: (hidden, dim)   b2: (dim,)
    compute_dtype: e.g. jnp.bfloat16 (recommended on v6e/v7x); accumulation stays f32.
    """
    dim, two_hidden = w1.shape
    hidden = two_hidden // 2

    if compute_dtype is not None:
        w1 = w1.astype(compute_dtype)
        b1 = b1.astype(compute_dtype)
        w2 = w2.astype(compute_dtype)
        b2 = b2.astype(compute_dtype)
    cdtype = w1.dtype
    itemsize = jnp.dtype(cdtype).itemsize

    dim_p = _round_up(dim, 128)
    vmem_cap = _vmem_capacity_bytes()

    # Resident if W1_x + W1_g + W2 occupy well under a quarter of physical VMEM.
    hp128 = _round_up(hidden, 128)
    weight_bytes = 3 * dim_p * hp128 * itemsize
    resident = weight_bytes <= vmem_cap // 4

    # Resident: only lane alignment needed. Streaming: pad to the fixed TH=512
    # reduction tile so there are fewer (cheaper) grid steps.
    hidden_p = hp128 if resident else _round_up(hidden, 512)

    # Zero padding is exact: padded gate columns -> gates=0 -> gelu(0)=0 -> g=0;
    # padded W2 rows/cols are zero.
    w1x = jnp.pad(w1[:, :hidden], ((0, dim_p - dim), (0, hidden_p - hidden)))
    w1g = jnp.pad(w1[:, hidden:], ((0, dim_p - dim), (0, hidden_p - hidden)))
    b1x = jnp.pad(b1[:hidden].reshape(1, hidden), ((0, 0), (0, hidden_p - hidden)))
    b1g = jnp.pad(b1[hidden:].reshape(1, hidden), ((0, 0), (0, hidden_p - hidden)))
    w2p = jnp.pad(w2, ((0, hidden_p - hidden), (0, dim_p - dim)))
    b2p = jnp.pad(b2.reshape(1, dim), ((0, 0), (0, dim_p - dim)))

    return dict(w1x=w1x, w1g=w1g, b1x=b1x, b1g=b1g, w2=w2p, b2=b2p,
                dim=dim, hidden=hidden, dim_p=dim_p, hidden_p=hidden_p,
                cdtype=cdtype, itemsize=itemsize,
                resident=resident, vmem_cap=vmem_cap)


# ---------------------------------------------------------------------------
# Forward
# ---------------------------------------------------------------------------

def feedforward(x, params):
    """SAINT FeedForward forward with pre-prepared (padded/split) parameters.

    x: (B, S, dim)  ->  (B, S, dim)
    """
    B, S, dim = x.shape
    assert dim == params["dim"], "x feature dim does not match prepared params"

    out_dtype = x.dtype
    cdtype = params["cdtype"]
    itemsize = params["itemsize"]
    dim_p = params["dim_p"]
    hidden_p = params["hidden_p"]
    vmem_cap = params["vmem_cap"]
    resident = params["resident"]

    x = x.astype(cdtype)
    T = B * S

    # Row tile: lane-dense output, sublane-aligned (bf16 packs 16 rows per vreg).
    row_align = 16 if itemsize == 2 else 8
    tm_cap = 512 if resident else (1024 if vmem_cap >= 96 * 2**20 else 512)
    TM = min(tm_cap, _round_up(T, row_align))
    # Prefer >= 2 row tiles so the "parallel" axis can shard across v7x's 2 TCs.
    if T >= 256 and _round_up(T, TM) // TM < 2:
        TM = _round_up((T + 1) // 2, row_align)
    T_p = _round_up(T, TM)
    n_row = T_p // TM

    x2d = jnp.pad(x.reshape(T, dim), ((0, T_p - T), (0, dim_p - dim)))

    w_bytes = (params["w1x"].size + params["w1g"].size + params["w2"].size
               + params["b1x"].size + params["b1g"].size + params["b2"].size) * itemsize
    act_bytes = x2d.size * itemsize + T_p * dim_p * jnp.dtype(out_dtype).itemsize
    flops = 6 * T_p * dim_p * hidden_p                 # 4*T*d*h (L1) + 2*T*h*d (L2)

    if resident:
        # -------- resident-weights path: grid over row tiles only --------
        vmem_needed = (3 * dim_p * hidden_p * itemsize          # W1_x, W1_g, W2
                       + (2 * hidden_p + dim_p) * itemsize      # biases
                       + 2 * TM * dim_p * itemsize              # x tile (double-buffered)
                       + 2 * TM * dim_p * jnp.dtype(out_dtype).itemsize   # out tile
                       + 3 * TM * hidden_p * 4)                 # xh / gates / g (f32)
        vmem_limit = int(min(max(int(1.5 * vmem_needed), 32 * 2**20),
                             int(0.8 * vmem_cap)))

        cost = pl.CostEstimate(
            flops=flops,
            transcendentals=T_p * hidden_p,
            bytes_accessed=w_bytes + act_bytes,   # weights read exactly once
        )

        out2d = pl.pallas_call(
            _ffn_resident_kernel,
            out_shape=jax.ShapeDtypeStruct((T_p, dim_p), out_dtype),
            grid_spec=pltpu.PrefetchScalarGridSpec(
                num_scalar_prefetch=0,
                grid=(n_row,),
                in_specs=[
                    pl.BlockSpec((TM, dim_p), lambda i: (i, 0)),        # x rows
                    pl.BlockSpec((dim_p, hidden_p), lambda i: (0, 0)),  # W1_x (resident)
                    pl.BlockSpec((dim_p, hidden_p), lambda i: (0, 0)),  # W1_g (resident)
                    pl.BlockSpec((1, hidden_p), lambda i: (0, 0)),      # b1_x
                    pl.BlockSpec((1, hidden_p), lambda i: (0, 0)),      # b1_g
                    pl.BlockSpec((hidden_p, dim_p), lambda i: (0, 0)),  # W2 (resident)
                    pl.BlockSpec((1, dim_p), lambda i: (0, 0)),         # b2
                ],
                out_specs=pl.BlockSpec((TM, dim_p), lambda i: (i, 0)),
            ),
            compiler_params=pltpu.CompilerParams(
                dimension_semantics=("parallel",),
                vmem_limit_bytes=vmem_limit,
            ),
            cost_estimate=cost,
        )(x2d, params["w1x"], params["w1g"], params["b1x"], params["b1g"],
          params["w2"], params["b2"])

    else:
        # -------- streaming fallback: hidden axis is an f32-accumulated reduction --------
        TH = 512
        n_hid = hidden_p // TH
        vmem_needed = (2 * TM * dim_p * itemsize                        # x
                       + 2 * TM * dim_p * jnp.dtype(out_dtype).itemsize  # out
                       + 2 * 2 * dim_p * TH * itemsize                  # W1_x + W1_g tiles
                       + 2 * TH * dim_p * itemsize                      # W2 tile
                       + 2 * (2 * TH + dim_p) * itemsize                # biases
                       + TM * dim_p * 4                                 # accumulator
                       + 3 * TM * TH * 4)                               # intermediates
        vmem_limit = int(min(max(2 * vmem_needed, 32 * 2**20),
                             int(0.8 * vmem_cap)))

        cost = pl.CostEstimate(
            flops=flops,
            transcendentals=T_p * hidden_p,
            # weights are re-streamed once per row tile in this layout
            bytes_accessed=n_row * w_bytes + act_bytes,
        )

        out2d = pl.pallas_call(
            _ffn_stream_kernel,
            out_shape=jax.ShapeDtypeStruct((T_p, dim_p), out_dtype),
            grid_spec=pltpu.PrefetchScalarGridSpec(
                num_scalar_prefetch=0,
                grid=(n_row, n_hid),
                in_specs=[
                    pl.BlockSpec((TM, dim_p), lambda i, k: (i, 0)),   # x rows
                    pl.BlockSpec((dim_p, TH), lambda i, k: (0, k)),   # W1_x
                    pl.BlockSpec((dim_p, TH), lambda i, k: (0, k)),   # W1_g
                    pl.BlockSpec((1, TH), lambda i, k: (0, k)),       # b1_x
                    pl.BlockSpec((1, TH), lambda i, k: (0, k)),       # b1_g
                    pl.BlockSpec((TH, dim_p), lambda i, k: (k, 0)),   # W2
                    pl.BlockSpec((1, dim_p), lambda i, k: (0, 0)),    # b2
                ],
                out_specs=pl.BlockSpec((TM, dim_p), lambda i, k: (i, 0)),
                scratch_shapes=[pltpu.VMEM((TM, dim_p), jnp.float32)],
            ),
            compiler_params=pltpu.CompilerParams(
                dimension_semantics=("parallel", "arbitrary"),
                vmem_limit_bytes=vmem_limit,
            ),
            cost_estimate=cost,
        )(x2d, params["w1x"], params["w1g"], params["b1x"], params["b1g"],
          params["w2"], params["b2"])

    return out2d[:T, :dim].reshape(B, S, dim)


def feedforward_from_raw(x, w1, b1, w2, b2, *, compute_dtype=None):
    """Convenience wrapper: prepares params on the fly (prefer caching prepare_ffn_params)."""
    return feedforward(x, prepare_ffn_params(w1, b1, w2, b2, compute_dtype=compute_dtype))


# ---------------------------------------------------------------------------
# Reference + tests
# ---------------------------------------------------------------------------

def reference(x, w1, b1, w2, b2):
    h = jnp.einsum("bsd,dh->bsh", x, w1) + b1
    hidden = h.shape[-1] // 2
    xh, gates = h[..., :hidden], h[..., hidden:]
    g = xh * jax.nn.gelu(gates, approximate=False)
    return jnp.einsum("bsh,hd->bsd", g, w2) + b2


def _make_params(key, dim, mult):
    hidden = dim * mult
    k_x, k_w1, k_b1, k_w2, k_b2 = jax.random.split(key, 5)
    w1 = jax.random.normal(k_w1, (dim, 2 * hidden), dtype=jnp.float32) * 0.05
    b1 = jax.random.normal(k_b1, (2 * hidden,), dtype=jnp.float32) * 0.05
    w2 = jax.random.normal(k_w2, (hidden, dim), dtype=jnp.float32) * 0.05
    b2 = jax.random.normal(k_b2, (dim,), dtype=jnp.float32) * 0.05
    return k_x, w1, b1, w2, b2


if __name__ == "__main__":
    key = jax.random.PRNGKey(0)
    key1, key2 = jax.random.split(key, 2)

    # Case 1: FeedForward(dim=32, mult=4): Linear(32->256), GEGLU -> 128, Linear(128->32).
    B, S, dim, mult = 2, 8, 32, 4
    k_x, w1, b1, w2, b2 = _make_params(key1, dim, mult)
    x = jax.random.normal(k_x, (B, S, dim), dtype=jnp.float32)

    params_f32 = prepare_ffn_params(w1, b1, w2, b2)   # pad/split once, reuse per call
    out = feedforward(x, params_f32)
    jax.block_until_ready(out)
    ref = reference(x, w1, b1, w2, b2)
    assert out.shape == (B, S, dim)
    assert jnp.allclose(out, ref, atol=2e-4, rtol=2e-4), "f32 mismatch vs reference (case 1)"

    # Case 2: non-lane-aligned dim and token count not a multiple of 8 (exercises padding).
    B2, S2, dim2, mult2 = 3, 7, 48, 4
    k_x2, w1_2, b1_2, w2_2, b2_2 = _make_params(key2, dim2, mult2)
    x2 = jax.random.normal(k_x2, (B2, S2, dim2), dtype=jnp.float32)

    out2 = feedforward_from_raw(x2, w1_2, b1_2, w2_2, b2_2)
    jax.block_until_ready(out2)
    ref2 = reference(x2, w1_2, b1_2, w2_2, b2_2)
    assert out2.shape == (B2, S2, dim2)
    assert jnp.allclose(out2, ref2, atol=2e-4, rtol=2e-4), "f32 mismatch vs reference (case 2)"

    # Case 3: bf16 operand path (recommended on v6e/v7x; f32 accumulation kept).
    params_bf16 = prepare_ffn_params(w1, b1, w2, b2, compute_dtype=jnp.bfloat16)
    out_bf16 = feedforward(x, params_bf16)
    jax.block_until_ready(out_bf16)
    assert jnp.allclose(out_bf16.astype(jnp.float32), ref, atol=5e-2, rtol=5e-2), \
        "bf16 mismatch vs reference"

    print("KERNEL_OK")
</pallas_src>

<mosaic_0001>
module attributes {stable_mosaic.version = 11 : i64} {
  func.func @_ffn_resident_kernel(%arg0: i32, %arg1: memref<16x128xf32, #tpu.memory_space<vmem>>, %arg2: memref<128x128xf32, #tpu.memory_space<vmem>>, %arg3: memref<128x128xf32, #tpu.memory_space<vmem>>, %arg4: memref<1x128xf32, #tpu.memory_space<vmem>>, %arg5: memref<1x128xf32, #tpu.memory_space<vmem>>, %arg6: memref<128x128xf32, #tpu.memory_space<vmem>>, %arg7: memref<1x128xf32, #tpu.memory_space<vmem>>, %arg8: memref<16x128xf32, #tpu.memory_space<vmem>>) attributes {dimension_semantics = [#tpu.dimension_semantics<parallel>], iteration_bounds = array<i64: 1>, scalar_prefetch = 0 : i64, scratch_operands = 0 : i64, tpu.core_type = #tpu.core_type<tc>, window_params = [{transform_indices = @transform_0, window_bounds = array<i64: 16, 128>}, {pipeline_mode = #tpu.pipeline_mode<synchronous>, transform_indices = @transform_1, window_bounds = array<i64: 128, 128>}, {pipeline_mode = #tpu.pipeline_mode<synchronous>, transform_indices = @transform_2, window_bounds = array<i64: 128, 128>}, {pipeline_mode = #tpu.pipeline_mode<synchronous>, transform_indices = @transform_3, window_bounds = array<i64: 1, 128>}, {pipeline_mode = #tpu.pipeline_mode<synchronous>, transform_indices = @transform_4, window_bounds = array<i64: 1, 128>}, {pipeline_mode = #tpu.pipeline_mode<synchronous>, transform_indices = @transform_5, window_bounds = array<i64: 128, 128>}, {pipeline_mode = #tpu.pipeline_mode<synchronous>, transform_indices = @transform_6, window_bounds = array<i64: 1, 128>}, {transform_indices = @transform_7, window_bounds = array<i64: 16, 128>}]} {
    %c0 = arith.constant 0 : index
    %c0_0 = arith.constant 0 : index
    %0 = vector.load %arg1[%c0, %c0_0] : memref<16x128xf32, #tpu.memory_space<vmem>>, vector<16x128xf32>
    %c0_1 = arith.constant 0 : index
    %c0_2 = arith.constant 0 : index
    %1 = vector.load %arg2[%c0_1, %c0_2] : memref<128x128xf32, #tpu.memory_space<vmem>>, vector<128x128xf32>
    %cst = arith.constant dense<0.000000e+00> : vector<16x128xf32>
    %2 = tpu.matmul %0, %1, %cst {dimension_numbers = #tpu.dot_dimension_numbers<[1], [0], [0], [1], [0, 0, 1, 1], [], []>} : vector<16x128xf32>, vector<128x128xf32>, vector<16x128xf32> -> vector<16x128xf32>
    %c0_3 = arith.constant 0 : index
    %c0_4 = arith.constant 0 : index
    %3 = vector.load %arg4[%c0_3, %c0_4] : memref<1x128xf32, #tpu.memory_space<vmem>>, vector<1x128xf32>
    %4 = vector.broadcast %3 : vector<1x128xf32> to vector<16x128xf32>
    %5 = arith.addf %2, %4 : vector<16x128xf32>
    %c0_5 = arith.constant 0 : index
    %c0_6 = arith.constant 0 : index
    %6 = vector.load %arg3[%c0_5, %c0_6] : memref<128x128xf32, #tpu.memory_space<vmem>>, vector<128x128xf32>
    %cst_7 = arith.constant dense<0.000000e+00> : vector<16x128xf32>
    %7 = tpu.matmul %0, %6, %cst_7 {dimension_numbers = #tpu.dot_dimension_numbers<[1], [0], [0], [1], [0, 0, 1, 1], [], []>} : vector<16x128xf32>, vector<128x128xf32>, vector<16x128xf32> -> vector<16x128xf32>
    %c0_8 = arith.constant 0 : index
    %c0_9 = arith.constant 0 : index
    %8 = vector.load %arg5[%c0_8, %c0_9] : memref<1x128xf32, #tpu.memory_space<vmem>>, vector<1x128xf32>
    %9 = vector.broadcast %8 : vector<1x128xf32> to vector<16x128xf32>
    %10 = arith.addf %7, %9 : vector<16x128xf32>
    %cst_10 = arith.constant 5.000000e-01 : f32
    %11 = vector.broadcast %cst_10 : f32 to vector<16x128xf32>
    %12 = arith.mulf %10, %11 : vector<16x128xf32>
    %cst_11 = arith.constant 0.707106769 : f32
    %13 = vector.broadcast %cst_11 : f32 to vector<16x128xf32>
    %14 = arith.mulf %10, %13 : vector<16x128xf32>
    %15 = math.erf %14 : vector<16x128xf32>
    %cst_12 = arith.constant 1.000000e+00 : f32
    %16 = vector.broadcast %cst_12 : f32 to vector<16x128xf32>
    %17 = arith.addf %16, %15 : vector<16x128xf32>
    %18 = arith.mulf %12, %17 : vector<16x128xf32>
    %19 = arith.mulf %5, %18 : vector<16x128xf32>
    %c0_13 = arith.constant 0 : index
    %c0_14 = arith.constant 0 : index
    %20 = vector.load %arg6[%c0_13, %c0_14] : memref<128x128xf32, #tpu.memory_space<vmem>>, vector<128x128xf32>
    %cst_15 = arith.constant dense<0.000000e+00> : vector<16x128xf32>
    %21 = tpu.matmul %19, %20, %cst_15 {dimension_numbers = #tpu.dot_dimension_numbers<[1], [0], [0], [1], [0, 0, 1, 1], [], []>} : vector<16x128xf32>, vector<128x128xf32>, vector<16x128xf32> -> vector<16x128xf32>
    %c0_16 = arith.constant 0 : index
    %c0_17 = arith.constant 0 : index
    %22 = vector.load %arg7[%c0_16, %c0_17] : memref<1x128xf32, #tpu.memory_space<vmem>>, vector<1x128xf32>
    %23 = vector.broadcast %22 : vector<1x128xf32> to vector<16x128xf32>
    %24 = arith.addf %21, %23 : vector<16x128xf32>
    %c0_18 = arith.constant 0 : index
    %c0_19 = arith.constant 0 : index
    %25 = vector.load %arg8[%c0_18, %c0_19] : memref<16x128xf32, #tpu.memory_space<vmem>>, vector<16x128xf32>
    tpu.vector_store %arg8[%c0_18, %c0_19], %24 {strides = array<i32>} : memref<16x128xf32, #tpu.memory_space<vmem>>, vector<16x128xf32>,
    return
  }
  func.func @transform_0(%arg0: i32) -> (i32, i32) {
    %c0_i32 = arith.constant 0 : i32
    %c0_i32_0 = arith.constant 0 : i32
    return %arg0, %c0_i32 : i32, i32
  }
  func.func @transform_1(%arg0: i32) -> (i32, i32) {
    %c0_i32 = arith.constant 0 : i32
    %c0_i32_0 = arith.constant 0 : i32
    %c0_i32_1 = arith.constant 0 : i32
    return %c0_i32, %c0_i32_0 : i32, i32
  }
  func.func @transform_2(%arg0: i32) -> (i32, i32) {
    %c0_i32 = arith.constant 0 : i32
    %c0_i32_0 = arith.constant 0 : i32
    %c0_i32_1 = arith.constant 0 : i32
    return %c0_i32, %c0_i32_0 : i32, i32
  }
  func.func @transform_3(%arg0: i32) -> (i32, i32) {
    %c0_i32 = arith.constant 0 : i32
    %c0_i32_0 = arith.constant 0 : i32
    %c0_i32_1 = arith.constant 0 : i32
    return %c0_i32, %c0_i32_0 : i32, i32
  }
  func.func @transform_4(%arg0: i32) -> (i32, i32) {
    %c0_i32 = arith.constant 0 : i32
    %c0_i32_0 = arith.constant 0 : i32
    %c0_i32_1 = arith.constant 0 : i32
    return %c0_i32, %c0_i32_0 : i32, i32
  }
  func.func @transform_5(%arg0: i32) -> (i32, i32) {
    %c0_i32 = arith.constant 0 : i32
    %c0_i32_0 = arith.constant 0 : i32
    %c0_i32_1 = arith.constant 0 : i32
    return %c0_i32, %c0_i32_0 : i32, i32
  }
  func.func @transform_6(%arg0: i32) -> (i32, i32) {
    %c0_i32 = arith.constant 0 : i32
    %c0_i32_0 = arith.constant 0 : i32
    %c0_i32_1 = arith.constant 0 : i32
    return %c0_i32, %c0_i32_0 : i32, i32
  }
  func.func @transform_7(%arg0: i32) -> (i32, i32) {
    %c0_i32 = arith.constant 0 : i32
    %c0_i32_0 = arith.constant 0 : i32
    return %arg0, %c0_i32 : i32, i32
  }
}

</mosaic_0001>

<llo_original>
// kernel: tpu_custom_call.1
$region0: #{tpu_custom_call.1}
  #allocation0 [shape = 'u32[]', space=smem, size = 0x4, offset = 0x4, fixed_abs, tag = 'smem constant byte address 0x4 - core index']
  #allocation1 [shape = 'u32[144,128]{1,0:T(1,128)}', space=vmem, size = 0x12000, scoped, tag = 'internal scratch']
  %s0 = inlined_call_operand.hbm [shape: f32[16,128], index: 0, kind: input, shape index: {}]
  %s1 = inlined_call_operand.hbm [shape: f32[128,128], index: 1, kind: input, shape index: {}]
  %s2 = inlined_call_operand.hbm [shape: f32[128,128], index: 2, kind: input, shape index: {}]
  %s3 = inlined_call_operand.vmem [shape: f32[1,128], index: 3, kind: input, shape index: {}]
  %s4 = inlined_call_operand.vmem [shape: f32[1,128], index: 4, kind: input, shape index: {}]
  %s5 = inlined_call_operand.hbm [shape: f32[128,128], index: 5, kind: input, shape index: {}]
  %s6 = inlined_call_operand.vmem [shape: f32[1,128], index: 6, kind: input, shape index: {}]
  %s7 = inlined_call_operand.hbm [shape: f32[16,128], index: 7, kind: output, shape index: {}]
  %s8 = sld [smem:[#allocation0]]
  $region54: #{tpu_custom_call.1} parent=0
    _
  %s10 = ssub.s32 1, %s8
  %s11 = scalar_select 0, %s10, %s8
  $region1: #{tpu_custom_call.1} parent=0
    #allocation2 [shape = 'u8[8192]{0}', space=vmem, size = 0x2000, scoped, tag = 'input window, operand 0, single buffered']
    #allocation3 [shape = 's32[1]{0}', space=sflag, size = 0x4, scoped, tag = 'scoped memory for tpu_custom_call.1']
    #allocation4 [shape = 's32[1]{0}', space=sflag, size = 0x4, scoped, tag = 'scoped memory for tpu_custom_call.1']
    #allocation5 [shape = 'u8[65536]{0}', space=vmem, size = 0x10000, scoped, tag = 'input window, operand 1, single buffered']
    #allocation6 [shape = 's32[1]{0}', space=sflag, size = 0x4, scoped, tag = 'scoped memory for tpu_custom_call.1']
    #allocation7 [shape = 'u8[65536]{0}', space=vmem, size = 0x10000, scoped, tag = 'input window, operand 2, single buffered']
    #allocation8 [shape = 'u8[65536]{0}', space=vmem, size = 0x10000, scoped, tag = 'input window, operand 5, single buffered']
    #allocation9 [shape = 's32[1]{0}', space=sflag, size = 0x4, scoped, tag = 'scoped memory for tpu_custom_call.1']
    #allocation10 [shape = 'u8[8192]{0}', space=vmem, size = 0x2000, scoped, tag = 'output window, operand 0, single buffered']
    %12 = vsyncpa [#allocation3], 0
    %13 = vsyncpa [#allocation6], 0
    %14 = vsyncpa [#allocation9], 0
    %15 = vsyncpa [#allocation4], 0
    // Predicated region
    $region2: #{tpu_custom_call.1} parent=1 // pred_check
      _
    $region3: #{tpu_custom_call.1} parent=1 // pred_check_branch
      %17 = sbr.rel (0) target = $region5
    $region4: #{tpu_custom_call.1} parent=1 // pred_region
      %s19 = ssub.s32 256, 256
      %20 = vsyncadd [#allocation3], %s19
      %s21 = sshll.u32 [#allocation2], 4
      %s22 = int_to_ptr.vmem [resolvable:$true] %s21
      %27 = dma.hbm_to_vmem [thread:$0]  %s0, 256, %s22, [#allocation3], 128, 128, 8
    $region5: #{tpu_custom_call.1} parent=1 // pred_fallthru
      _
    // Predicated region
    $region6: #{tpu_custom_call.1} parent=1 // pred_check
      _
    $region7: #{tpu_custom_call.1} parent=1 // pred_check_branch
      %29 = sbr.rel (0) target = $region9
    $region8: #{tpu_custom_call.1} parent=1 // pred_region
      %s31 = ssub.s32 2048, 2048
      %32 = vsyncadd [#allocation6], %s31
      %s33 = sshll.u32 [#allocation5], 4
      %s34 = int_to_ptr.vmem [resolvable:$true] %s33
      %39 = dma.hbm_to_vmem [thread:$0]  %s1, 2048, %s34, [#allocation6], 128, 128, 8
    $region9: #{tpu_custom_call.1} parent=1 // pred_fallthru
      _
    // Predicated region
    $region10: #{tpu_custom_call.1} parent=1 // pred_check
      _
    $region11: #{tpu_custom_call.1} parent=1 // pred_check_branch
      %41 = sbr.rel (0) target = $region13
    $region12: #{tpu_custom_call.1} parent=1 // pred_region
      %s43 = ssub.s32 2048, 2048
      %44 = vsyncadd [#allocation6], %s43
      %s45 = sshll.u32 [#allocation7], 4
      %s46 = int_to_ptr.vmem [resolvable:$true] %s45
      %51 = dma.hbm_to_vmem [thread:$0]  %s2, 2048, %s46, [#allocation6], 128, 128, 8
    $region13: #{tpu_custom_call.1} parent=1 // pred_fallthru
      _
    // Predicated region
    $region14: #{tpu_custom_call.1} parent=1 // pred_check
      _
    $region15: #{tpu_custom_call.1} parent=1 // pred_check_branch
      %53 = sbr.rel (0) target = $region17
    $region16: #{tpu_custom_call.1} parent=1 // pred_region
      _
    $region17: #{tpu_custom_call.1} parent=1 // pred_fallthru
      _
    // Predicated region
    $region18: #{tpu_custom_call.1} parent=1 // pred_check
      _
    $region19: #{tpu_custom_call.1} parent=1 // pred_check_branch
      %55 = sbr.rel (0) target = $region21
    $region20: #{tpu_custom_call.1} parent=1 // pred_region
      _
    $region21: #{tpu_custom_call.1} parent=1 // pred_fallthru
      _
    // Predicated region
    $region22: #{tpu_custom_call.1} parent=1 // pred_check
      _
    $region23: #{tpu_custom_call.1} parent=1 // pred_check_branch
      %57 = sbr.rel (0) target = $region25
    $region24: #{tpu_custom_call.1} parent=1 // pred_region
      %s59 = ssub.s32 2048, 2048
      %60 = vsyncadd [#allocation9], %s59
      %s61 = sshll.u32 [#allocation8], 4
      %s62 = int_to_ptr.vmem [resolvable:$true] %s61
      %67 = dma.hbm_to_vmem [thread:$0]  %s5, 2048, %s62, [#allocation9], 128, 128, 8
    $region25: #{tpu_custom_call.1} parent=1 // pred_fallthru
      _
    // Predicated region
    $region26: #{tpu_custom_call.1} parent=1 // pred_check
      _
    $region27: #{tpu_custom_call.1} parent=1 // pred_check_branch
      %69 = sbr.rel (0) target = $region29
    $region28: #{tpu_custom_call.1} parent=1 // pred_region
      _
    $region29: #{tpu_custom_call.1} parent=1 // pred_fallthru
      _
    // Predicated region
    $region30: #{tpu_custom_call.1} parent=1 // pred_check
      _
    $region31: #{tpu_custom_call.1} parent=1 // pred_check_branch
      %71 = sbr.rel (0) target = $region33
    $region32: #{tpu_custom_call.1} parent=1 // pred_region
      %72 = dma.done [#allocation3], 256
    $region33: #{tpu_custom_call.1} parent=1 // pred_fallthru
      _
    // Predicated region
    $region34: #{tpu_custom_call.1} parent=1 // pred_check
      _
    $region35: #{tpu_custom_call.1} parent=1 // pred_check_branch
      %74 = sbr.rel (0) target = $region37
    $region36: #{tpu_custom_call.1} parent=1 // pred_region
      %75 = dma.done [#allocation6], 2048
    $region37: #{tpu_custom_call.1} parent=1 // pred_fallthru
      _
    // Predicated region
    $region38: #{tpu_custom_call.1} parent=1 // pred_check
      _
    $region39: #{tpu_custom_call.1} parent=1 // pred_check_branch
      %77 = sbr.rel (0) target = $region41
    $region40: #{tpu_custom_call.1} parent=1 // pred_region
      %78 = dma.done [#allocation6], 2048
    $region41: #{tpu_custom_call.1} parent=1 // pred_fallthru
      _
    // Predicated region
    $region42: #{tpu_custom_call.1} parent=1 // pred_check
      _
    $region43: #{tpu_custom_call.1} parent=1 // pred_check_branch
      %80 = sbr.rel (0) target = $region45
    $region44: #{tpu_custom_call.1} parent=1 // pred_region
      %81 = dma.done [#allocation9], 2048
    $region45: #{tpu_custom_call.1} parent=1 // pred_fallthru
      _
    %v82 = vld [vmem:[#allocation2] sm:$0xff]
    %v83 = vld [vmem:[#allocation2 + $0x8] sm:$0xff]
    %v84 = vld [vmem:[#allocation5] sm:$0xff]
    %v85 = vld [vmem:[#allocation5 + $0x8] sm:$0xff]
    %v86 = vld [vmem:[#allocation5 + $0x10] sm:$0xff]
    %v87 = vld [vmem:[#allocation5 + $0x18] sm:$0xff]
    %v88 = vld [vmem:[#allocation5 + $0x20] sm:$0xff]
    %v89 = vld [vmem:[#allocation5 + $0x28] sm:$0xff]
    %v90 = vld [vmem:[#allocation5 + $0x30] sm:$0xff]
    %v91 = vld [vmem:[#allocation5 + $0x38] sm:$0xff]
    %v92 = vld [vmem:[#allocation5 + $0x40] sm:$0xff]
    %v93 = vld [vmem:[#allocation5 + $0x48] sm:$0xff]
    %v94 = vld [vmem:[#allocation5 + $0x50] sm:$0xff]
    %v95 = vld [vmem:[#allocation5 + $0x58] sm:$0xff]
    %v96 = vld [vmem:[#allocation5 + $0x60] sm:$0xff]
    %v97 = vld [vmem:[#allocation5 + $0x68] sm:$0xff]
    %v98 = vld [vmem:[#allocation5 + $0x70] sm:$0xff]
    %v99 = vld [vmem:[#allocation5 + $0x78] sm:$0xff]
    %v100 = vld [vmem:[%s3] sm:$0x1]
    %v102 = vlaneseq
    %v103 = vshrl.u32 %v102, 7
    %v104 = vsub.s32 0, %v103
    %v105 = vrot.slane %v100, %v104
    %107 = vmatprep.subr.mxu0 0.0
    %108 = vmatpush1.msra.mxu0 %v84
    %109 = vmatprep.subr.mxu0 0.0
    %110 = vmatpush1.msra.mxu0 %v85
    %111 = vmatprep.subr.mxu0 0.0
    %112 = vmatpush1.msra.mxu0 %v86
    %113 = vmatprep.subr.mxu0 0.0
    %114 = vmatpush1.msra.mxu0 %v87
    %115 = vmatprep.subr.mxu0 0.0
    %116 = vmatpush1.msra.mxu0 %v88
    %117 = vmatprep.subr.mxu0 0.0
    %118 = vmatpush1.msra.mxu0 %v89
    %119 = vmatprep.subr.mxu0 0.0
    %120 = vmatpush1.msra.mxu0 %v90
    %121 = vmatprep.subr.mxu0 0.0
    %122 = vmatpush1.msra.mxu0 %v91
    %123 = vmatprep.subr.mxu0 0.0
    %124 = vmatpush1.msra.mxu0 %v92
    %125 = vmatprep.subr.mxu0 0.0
    %126 = vmatpush1.msra.mxu0 %v93
    %127 = vmatprep.subr.mxu0 0.0
    %128 = vmatpush1.msra.mxu0 %v94
    %129 = vmatprep.subr.mxu0 0.0
    %130 = vmatpush1.msra.mxu0 %v95
    %131 = vmatprep.subr.mxu0 0.0
    %132 = vmatpush1.msra.mxu0 %v96
    %133 = vmatprep.subr.mxu0 0.0
    %134 = vmatpush1.msra.mxu0 %v97
    %135 = vmatprep.subr.mxu0 0.0
    %136 = vmatpush1.msra.mxu0 %v98
    %137 = vmatprep.subr.mxu0 0.0
    %138 = vmatpush1.msra.mxu0 %v99
    %139 = vmatprep.subr.mxu0 0.0
    %140 = vmatpush1.msra.mxu0 0.0
    %141 = vmatprep.subr.mxu0 0.0
    %142 = vmatpush1.msra.mxu0 0.0
    %143 = vmatprep.subr.mxu0 0.0
    %144 = vmatpush1.msra.mxu0 0.0
    %145 = vmatprep.subr.mxu0 0.0
    %146 = vmatpush1.msra.mxu0 0.0
    %147 = vmatprep.subr.mxu0 0.0
    %148 = vmatpush1.msra.mxu0 0.0
    %149 = vmatprep.subr.mxu0 0.0
    %150 = vmatpush1.msra.mxu0 0.0
    %151 = vmatprep.subr.mxu0 0.0
    %152 = vmatpush1.msra.mxu0 0.0
    %153 = vmatprep.subr.mxu0 0.0
    %154 = vmatpush1.msra.mxu0 0.0
    %155 = vmatprep.subr.mxu0 0.0
    %156 = vmatpush1.msra.mxu0 0.0
    %157 = vmatprep.subr.mxu0 0.0
    %158 = vmatpush1.msra.mxu0 0.0
    %159 = vmatprep.subr.mxu0 0.0
    %160 = vmatpush1.msra.mxu0 0.0
    %161 = vmatprep.subr.mxu0 0.0
    %162 = vmatpush1.msra.mxu0 0.0
    %163 = vmatprep.subr.mxu0 0.0
    %164 = vmatpush1.msra.mxu0 0.0
    %165 = vmatprep.subr.mxu0 0.0
    %166 = vmatpush1.msra.mxu0 0.0
    %167 = vmatprep.subr.mxu0 0.0
    %168 = vmatpush1.msra.mxu0 0.0
    %169 = vmatprep.subr.mxu0 0.0
    %170 = vmatpush1.msra.mxu0 0.0
    %171 = vmatprep.mubr.f32.mxu0 0.0
    %172 = vmatmul.mubr.f32.gmra.mrb[0].mxu0 %v82
    %v173 = vpop.f32.mrb[0].mxu0
    %v174 = vadd.f32 %v105, %v173
    %v175 = vpop.f32.mrb[0].mxu0
    %176 = vmatprep.mubr.f32.mxu0 0.0
    %177 = vmatmul.mubr.f32.gmra.mrb[0].mxu0 %v83
    %v178 = vpop.f32.mrb[0].mxu0
    %v179 = vadd.f32 %v105, %v178
    %v180 = vpop.f32.mrb[0].mxu0
    %181 = vdwg.mxu0
    %v182 = vld [vmem:[#allocation7] sm:$0xff]
    %v183 = vld [vmem:[#allocation7 + $0x8] sm:$0xff]
    %v184 = vld [vmem:[#allocation7 + $0x10] sm:$0xff]
    %v185 = vld [vmem:[#allocation7 + $0x18] sm:$0xff]
    %v186 = vld [vmem:[#allocation7 + $0x20] sm:$0xff]
    %v187 = vld [vmem:[#allocation7 + $0x28] sm:$0xff]
    %v188 = vld [vmem:[#allocation7 + $0x30] sm:$0xff]
    %v189 = vld [vmem:[#allocation7 + $0x38] sm:$0xff]
    %v190 = vld [vmem:[#allocation7 + $0x40] sm:$0xff]
    %v191 = vld [vmem:[#allocation7 + $0x48] sm:$0xff]
    %v192 = vld [vmem:[#allocation7 + $0x50] sm:$0xff]
    %v193 = vld [vmem:[#allocation7 + $0x58] sm:$0xff]
    %v194 = vld [vmem:[#allocation7 + $0x60] sm:$0xff]
    %v195 = vld [vmem:[#allocation7 + $0x68] sm:$0xff]
    %v196 = vld [vmem:[#allocation7 + $0x70] sm:$0xff]
    %v197 = vld [vmem:[#allocation7 + $0x78] sm:$0xff]
    %v198 = vld [vmem:[%s4] sm:$0x1]
    %v200 = vlaneseq
    %v201 = vshrl.u32 %v200, 7
    %v202 = vsub.s32 0, %v201
    %v203 = vrot.slane %v198, %v202
    %205 = vmatprep.subr.mxu0 0.0
    %206 = vmatpush1.msra.mxu0 %v182
    %207 = vmatprep.subr.mxu0 0.0
    %208 = vmatpush1.msra.mxu0 %v183
    %209 = vmatprep.subr.mxu0 0.0
    %210 = vmatpush1.msra.mxu0 %v184
    %211 = vmatprep.subr.mxu0 0.0
    %212 = vmatpush1.msra.mxu0 %v185
    %213 = vmatprep.subr.mxu0 0.0
    %214 = vmatpush1.msra.mxu0 %v186
    %215 = vmatprep.subr.mxu0 0.0
    %216 = vmatpush1.msra.mxu0 %v187
    %217 = vmatprep.subr.mxu0 0.0
    %218 = vmatpush1.msra.mxu0 %v188
    %219 = vmatprep.subr.mxu0 0.0
    %220 = vmatpush1.msra.mxu0 %v189
    %221 = vmatprep.subr.mxu0 0.0
    %222 = vmatpush1.msra.mxu0 %v190
    %223 = vmatprep.subr.mxu0 0.0
    %224 = vmatpush1.msra.mxu0 %v191
    %225 = vmatprep.subr.mxu0 0.0
    %226 = vmatpush1.msra.mxu0 %v192
    %227 = vmatprep.subr.mxu0 0.0
    %228 = vmatpush1.msra.mxu0 %v193
    %229 = vmatprep.subr.mxu0 0.0
    %230 = vmatpush1.msra.mxu0 %v194
    %231 = vmatprep.subr.mxu0 0.0
    %232 = vmatpush1.msra.mxu0 %v195
    %233 = vmatprep.subr.mxu0 0.0
    %234 = vmatpush1.msra.mxu0 %v196
    %235 = vmatprep.subr.mxu0 0.0
    %236 = vmatpush1.msra.mxu0 %v197
    %237 = vmatprep.subr.mxu0 0.0
    %238 = vmatpush1.msra.mxu0 0.0
    %239 = vmatprep.subr.mxu0 0.0
    %240 = vmatpush1.msra.mxu0 0.0
    %241 = vmatprep.subr.mxu0 0.0
    %242 = vmatpush1.msra.mxu0 0.0
    %243 = vmatprep.subr.mxu0 0.0
    %244 = vmatpush1.msra.mxu0 0.0
    %245 = vmatprep.subr.mxu0 0.0
    %246 = vmatpush1.msra.mxu0 0.0
    %247 = vmatprep.subr.mxu0 0.0
    %248 = vmatpush1.msra.mxu0 0.0
    %249 = vmatprep.subr.mxu0 0.0
    %250 = vmatpush1.msra.mxu0 0.0
    %251 = vmatprep.subr.mxu0 0.0
    %252 = vmatpush1.msra.mxu0 0.0
    %253 = vmatprep.subr.mxu0 0.0
    %254 = vmatpush1.msra.mxu0 0.0
    %255 = vmatprep.subr.mxu0 0.0
    %256 = vmatpush1.msra.mxu0 0.0
    %257 = vmatprep.subr.mxu0 0.0
    %258 = vmatpush1.msra.mxu0 0.0
    %259 = vmatprep.subr.mxu0 0.0
    %260 = vmatpush1.msra.mxu0 0.0
    %261 = vmatprep.subr.mxu0 0.0
    %262 = vmatpush1.msra.mxu0 0.0
    %263 = vmatprep.subr.mxu0 0.0
    %264 = vmatpush1.msra.mxu0 0.0
    %265 = vmatprep.subr.mxu0 0.0
    %266 = vmatpush1.msra.mxu0 0.0
    %267 = vmatprep.subr.mxu0 0.0
    %268 = vmatpush1.msra.mxu0 0.0
    %269 = vmatprep.mubr.f32.mxu0 0.0
    %270 = vmatmul.mubr.f32.gmra.mrb[0].mxu0 %v82
    %v271 = vpop.f32.mrb[0].mxu0
    %v272 = vadd.f32 %v203, %v271
    %v273 = vpop.f32.mrb[0].mxu0
    %274 = vmatprep.mubr.f32.mxu0 0.0
    %275 = vmatmul.mubr.f32.gmra.mrb[0].mxu0 %v83
    %v276 = vpop.f32.mrb[0].mxu0
    %v277 = vadd.f32 %v203, %v276
    %v278 = vpop.f32.mrb[0].mxu0
    %279 = vdwg.mxu0
    %v280 = vmul.f32 %v272, 0.5
    %v281 = vmul.f32 %v277, 0.5
    %v282 = vmul.f32 %v272, 0.70710677
    %v283 = vmul.f32 %v277, 0.70710677
    %v284 = verf.f32.pop %v282
    %v285 = verf.f32.pop %v283
    %v286 = vadd.f32 %v284, 1.0
    %v287 = vadd.f32 %v285, 1.0
    %v288 = vmul.f32 %v280, %v286
    %v289 = vmul.f32 %v281, %v287
    %v290 = vmul.f32 %v174, %v288
    %v291 = vmul.f32 %v179, %v289
    %v292 = vld [vmem:[#allocation8] sm:$0xff]
    %v293 = vld [vmem:[#allocation8 + $0x8] sm:$0xff]
    %v294 = vld [vmem:[#allocation8 + $0x10] sm:$0xff]
    %v295 = vld [vmem:[#allocation8 + $0x18] sm:$0xff]
    %v296 = vld [vmem:[#allocation8 + $0x20] sm:$0xff]
    %v297 = vld [vmem:[#allocation8 + $0x28] sm:$0xff]
    %v298 = vld [vmem:[#allocation8 + $0x30] sm:$0xff]
    %v299 = vld [vmem:[#allocation8 + $0x38] sm:$0xff]
    %v300 = vld [vmem:[#allocation8 + $0x40] sm:$0xff]
    %v301 = vld [vmem:[#allocation8 + $0x48] sm:$0xff]
    %v302 = vld [vmem:[#allocation8 + $0x50] sm:$0xff]
    %v303 = vld [vmem:[#allocation8 + $0x58] sm:$0xff]
    %v304 = vld [vmem:[#allocation8 + $0x60] sm:$0xff]
    %v305 = vld [vmem:[#allocation8 + $0x68] sm:$0xff]
    %v306 = vld [vmem:[#allocation8 + $0x70] sm:$0xff]
    %v307 = vld [vmem:[#allocation8 + $0x78] sm:$0xff]
    %v308 = vld [vmem:[%s6] sm:$0x1]
    %v310 = vlaneseq
    %v311 = vshrl.u32 %v310, 7
    %v312 = vsub.s32 0, %v311
    %v313 = vrot.slane %v308, %v312
    %315 = vmatprep.subr.mxu0 0.0
    %316 = vmatpush1.msra.mxu0 %v292
    %317 = vmatprep.subr.mxu0 0.0
    %318 = vmatpush1.msra.mxu0 %v293
    %319 = vmatprep.subr.mxu0 0.0
    %320 = vmatpush1.msra.mxu0 %v294
    %321 = vmatprep.subr.mxu0 0.0
    %322 = vmatpush1.msra.mxu0 %v295
    %323 = vmatprep.subr.mxu0 0.0
    %324 = vmatpush1.msra.mxu0 %v296
    %325 = vmatprep.subr.mxu0 0.0
    %326 = vmatpush1.msra.mxu0 %v297
    %327 = vmatprep.subr.mxu0 0.0
    %328 = vmatpush1.msra.mxu0 %v298
    %329 = vmatprep.subr.mxu0 0.0
    %330 = vmatpush1.msra.mxu0 %v299
    %331 = vmatprep.subr.mxu0 0.0
    %332 = vmatpush1.msra.mxu0 %v300
    %333 = vmatprep.subr.mxu0 0.0
    %334 = vmatpush1.msra.mxu0 %v301
    %335 = vmatprep.subr.mxu0 0.0
    %336 = vmatpush1.msra.mxu0 %v302
    %337 = vmatprep.subr.mxu0 0.0
    %338 = vmatpush1.msra.mxu0 %v303
    %339 = vmatprep.subr.mxu0 0.0
    %340 = vmatpush1.msra.mxu0 %v304
    %341 = vmatprep.subr.mxu0 0.0
    %342 = vmatpush1.msra.mxu0 %v305
    %343 = vmatprep.subr.mxu0 0.0
    %344 = vmatpush1.msra.mxu0 %v306
    %345 = vmatprep.subr.mxu0 0.0
    %346 = vmatpush1.msra.mxu0 %v307
    %347 = vmatprep.subr.mxu0 0.0
    %348 = vmatpush1.msra.mxu0 0.0
    %349 = vmatprep.subr.mxu0 0.0
    %350 = vmatpush1.msra.mxu0 0.0
    %351 = vmatprep.subr.mxu0 0.0
    %352 = vmatpush1.msra.mxu0 0.0
    %353 = vmatprep.subr.mxu0 0.0
    %354 = vmatpush1.msra.mxu0 0.0
    %355 = vmatprep.subr.mxu0 0.0
    %356 = vmatpush1.msra.mxu0 0.0
    %357 = vmatprep.subr.mxu0 0.0
    %358 = vmatpush1.msra.mxu0 0.0
    %359 = vmatprep.subr.mxu0 0.0
    %360 = vmatpush1.msra.mxu0 0.0
    %361 = vmatprep.subr.mxu0 0.0
    %362 = vmatpush1.msra.mxu0 0.0
    %363 = vmatprep.subr.mxu0 0.0
    %364 = vmatpush1.msra.mxu0 0.0
    %365 = vmatprep.subr.mxu0 0.0
    %366 = vmatpush1.msra.mxu0 0.0
    %367 = vmatprep.subr.mxu0 0.0
    %368 = vmatpush1.msra.mxu0 0.0
    %369 = vmatprep.subr.mxu0 0.0
    %370 = vmatpush1.msra.mxu0 0.0
    %371 = vmatprep.subr.mxu0 0.0
    %372 = vmatpush1.msra.mxu0 0.0
    %373 = vmatprep.subr.mxu0 0.0
    %374 = vmatpush1.msra.mxu0 0.0
    %375 = vmatprep.subr.mxu0 0.0
    %376 = vmatpush1.msra.mxu0 0.0
    %377 = vmatprep.subr.mxu0 0.0
    %378 = vmatpush1.msra.mxu0 0.0
    %379 = vmatprep.mubr.f32.mxu0 0.0
    %380 = vmatmul.mubr.f32.gmra.mrb[0].mxu0 %v290
    %v381 = vpop.f32.mrb[0].mxu0
    %v382 = vadd.f32 %v313, %v381
    %v383 = vpop.f32.mrb[0].mxu0
    %384 = vmatprep.mubr.f32.mxu0 0.0
    %385 = vmatmul.mubr.f32.gmra.mrb[0].mxu0 %v291
    %v386 = vpop.f32.mrb[0].mxu0
    %v387 = vadd.f32 %v313, %v386
    %v388 = vpop.f32.mrb[0].mxu0
    %389 = vdwg.mxu0
    %390 = vst [vmem:[#allocation10] sm:$0xff] %v382
    %391 = vst [vmem:[#allocation10 + $0x8] sm:$0xff] %v387
    // Predicated region
    $region46: #{tpu_custom_call.1} parent=1 // pred_check
      _
    $region47: #{tpu_custom_call.1} parent=1 // pred_check_branch
      %393 = sbr.rel (0) target = $region49
    $region48: #{tpu_custom_call.1} parent=1 // pred_region
      %s395 = ssub.s32 256, 256
      %396 = vsyncadd [#allocation4], %s395
      %s397 = sshll.u32 [#allocation10], 4
      %s398 = int_to_ptr.vmem [resolvable:$true] %s397
      %403 = dma.vmem_to_hbm [thread:$0]  %s398, 256, %s7, [#allocation4], 128, 128, 8
    $region49: #{tpu_custom_call.1} parent=1 // pred_fallthru
      _
    // Predicated region
    $region50: #{tpu_custom_call.1} parent=1 // pred_check
      _
    $region51: #{tpu_custom_call.1} parent=1 // pred_check_branch
      %405 = sbr.rel (0) target = $region53
    $region52: #{tpu_custom_call.1} parent=1 // pred_region
      %406 = dma.done [#allocation4], 256
    $region53: #{tpu_custom_call.1} parent=1 // pred_fallthru
      _
    %407 = vsyncpa [#allocation3], 1
    %408 = vsyncpa [#allocation6], 1
    %409 = vsyncpa [#allocation9], 1
    %410 = vsyncpa [#allocation4], 1

</llo_original>
